<compile_context>
chip_gen: v6e
topology: v6e:2x2x1
jax: 0.10.0
libtpu: 0.0.40
codegen_flags: <defaults>
</compile_context>

<pallas_src>
import jax
import jax.numpy as jnp
from jax.experimental import pallas as pl
from jax.experimental.pallas import tpu as pltpu


# ---------------------------------------------------------------------------
# Helpers
# ---------------------------------------------------------------------------

_MIB = 1024 * 1024
_VMEM_BUDGET = 44 * _MIB       # working-set budget (safe on v7x: 64 MiB physical)
_VMEM_LIMIT_CAP = 48 * _MIB    # never request more than this scoped VMEM
_WRES_WEIGHT_CAP = 16 * _MIB   # max (padded) weight size for the resident path


def _round_up(v, m):
    return ((v + m - 1) // m) * m


def _cdiv(a, b):
    return (a + b - 1) // b


def _choose_tile(dim, target, align):
    """Aligned tile <= target (target must be a multiple of align).

    Uses balanced tiles (dim split into cdiv(dim, target) nearly-equal chunks)
    instead of a full-dim fallback, so a single tile can never blow VMEM and
    padding waste stays small for non-divisible dims.
    """
    dim_a = _round_up(dim, align)
    if dim_a <= target:
        return dim_a
    n_tiles = _cdiv(dim_a, target)
    return _round_up(_cdiv(dim_a, n_tiles), align)


def _pad2(a, rows, cols):
    pr = rows - a.shape[0]
    pc = cols - a.shape[1]
    if pr == 0 and pc == 0:
        return a
    return jnp.pad(a, ((0, pr), (0, pc)))


# ---------------------------------------------------------------------------
# Kernels
# ---------------------------------------------------------------------------

def _linear_wres_kernel(x_ref, w_ref, b_ref, o_ref):
    # Whole (padded) weight + bias resident in VMEM; 1-D grid over batch tiles.
    acc = jnp.dot(x_ref[...], w_ref[...], preferred_element_type=jnp.float32)
    o_ref[...] = (acc + b_ref[...].astype(jnp.float32)).astype(o_ref.dtype)


def _linear_tiled_kernel(x_ref, w_ref, b_ref, o_ref, acc_ref):
    # x_ref: (tb, tk)   w_ref: (tk, tn)   b_ref: (1, tn)
    # o_ref: (tb, tn)   acc_ref: (tb, tn) f32 scratch, resident across K axis.
    k = pl.program_id(2)

    @pl.when(k == 0)
    def _():
        acc_ref[...] = jnp.zeros_like(acc_ref)

    acc_ref[...] += jnp.dot(
        x_ref[...], w_ref[...], preferred_element_type=jnp.float32
    )

    @pl.when(k == pl.num_programs(2) - 1)
    def _():
        o_ref[...] = (
            acc_ref[...] + b_ref[...].astype(jnp.float32)
        ).astype(o_ref.dtype)


# ---------------------------------------------------------------------------
# Wrapper
# ---------------------------------------------------------------------------

@jax.jit
def linear_pallas(x, w_t, b):
    """Computes x @ w_t + b with a Pallas TPU kernel.

    x:   (B, in_f)
    w_t: (in_f, out_f)   (PyTorch weight transposed)
    b:   (1, out_f)

    Prefer bf16 inputs on v5e/v6e/v7x for full MXU rate (f32 on v5e runs the
    MXU at ~1/3 rate); accumulation is always f32.
    """
    B, in_f = x.shape
    out_f = w_t.shape[1]
    dtype = x.dtype
    itemsize = jnp.dtype(dtype).itemsize
    row_align = 8 if itemsize >= 4 else 16

    # ------------------------------------------------------------------
    # Path A: whole weight resident in VMEM (weight + x streamed from HBM
    # exactly once). This is the HBM-traffic floor for a linear layer.
    # ------------------------------------------------------------------
    k_pa = _round_up(in_f, 128)          # lane dim of x / sublane dim of w
    n_pa = _round_up(out_f, 128)         # lane-dense output stores
    w_bytes_a = k_pa * n_pa * itemsize

    def _need_a(tb_):
        # weight + bias budgeted 2x (conservative), x/out tiles double-buffered.
        return (2 * w_bytes_a
                + 2 * n_pa * itemsize
                + 2 * tb_ * k_pa * itemsize
                + 2 * tb_ * n_pa * itemsize)

    use_wres = w_bytes_a <= _WRES_WEIGHT_CAP
    if use_wres:
        tb_a = _choose_tile(B, 1024, row_align)
        while _need_a(tb_a) > _VMEM_BUDGET and tb_a > row_align:
            tb_a = max(row_align, _round_up(tb_a // 2, row_align))
        use_wres = _need_a(tb_a) <= _VMEM_BUDGET

    if use_wres:
        # Keep >= 2 batch blocks when possible so both v7x TensorCores get work.
        if _round_up(B, tb_a) // tb_a == 1 and tb_a >= 2 * row_align:
            tb_a = _round_up(_cdiv(tb_a, 2), row_align)
        b_p = _round_up(B, tb_a)
        grid_b = b_p // tb_a

        x_p = _pad2(x, b_p, k_pa)
        w_p = _pad2(w_t, k_pa, n_pa)
        b_pd = _pad2(b, 1, n_pa)

        need = _need_a(tb_a)
        vmem_limit = int(min(max(2 * need, 32 * _MIB), _VMEM_LIMIT_CAP))
        cost = pl.CostEstimate(
            flops=int(2 * b_p * k_pa * n_pa),
            transcendentals=0,
            bytes_accessed=int(
                (b_p * k_pa + k_pa * n_pa + n_pa + b_p * n_pa) * itemsize
            ),
        )

        out = pl.pallas_call(
            _linear_wres_kernel,
            out_shape=jax.ShapeDtypeStruct((b_p, n_pa), dtype),
            grid_spec=pltpu.PrefetchScalarGridSpec(
                num_scalar_prefetch=0,
                grid=(grid_b,),
                in_specs=[
                    pl.BlockSpec((tb_a, k_pa), lambda i: (i, 0)),   # x tile
                    pl.BlockSpec((k_pa, n_pa), lambda i: (0, 0)),   # full weight
                    pl.BlockSpec((1, n_pa), lambda i: (0, 0)),      # full bias
                ],
                out_specs=pl.BlockSpec((tb_a, n_pa), lambda i: (i, 0)),
            ),
            compiler_params=pltpu.CompilerParams(
                dimension_semantics=("parallel",),
                vmem_limit_bytes=vmem_limit,
            ),
            cost_estimate=cost,
        )(x_p, w_p, b_pd)
        return out[:B, :out_f]

    # ------------------------------------------------------------------
    # Path B: general 3-D tiled GEMM with f32 accumulator scratch.
    # ------------------------------------------------------------------
    tb = _choose_tile(B, 512, row_align)
    tn = _choose_tile(out_f, 512, 128)
    tk = _choose_tile(in_f, 1024, 128)

    def _need_b(tb_, tn_, tk_):
        return (2 * (tb_ * tk_ + tk_ * tn_ + tb_ * tn_) * itemsize
                + 2 * tn_ * itemsize
                + tb_ * tn_ * 4)

    # Shrink tiles (K first, then N, then batch) if over budget — replaces the
    # old full-dim fallback that could exceed v7x's 64 MiB VMEM.
    while _need_b(tb, tn, tk) > _VMEM_BUDGET:
        if tk > 512:
            tk = _round_up(tk // 2, 128)
        elif tn > 256:
            tn = _round_up(tn // 2, 128)
        elif tb > row_align:
            tb = max(row_align, _round_up(tb // 2, row_align))
        else:
            break

    b_p = _round_up(B, tb)
    n_p = _round_up(out_f, tn)
    k_p = _round_up(in_f, tk)
    grid_b, grid_n, grid_k = b_p // tb, n_p // tn, k_p // tk

    # v7x dual-TC: make sure at least one parallel axis has >= 2 blocks.
    if grid_b == 1 and grid_n == 1 and tb >= 2 * row_align:
        tb = _round_up(_cdiv(tb, 2), row_align)
        b_p = _round_up(B, tb)
        grid_b = b_p // tb

    x_p = _pad2(x, b_p, k_p)
    w_p = _pad2(w_t, k_p, n_p)
    b_pd = _pad2(b, 1, n_p)

    need = _need_b(tb, tn, tk)
    vmem_limit = int(min(max(2 * need, 32 * _MIB), _VMEM_LIMIT_CAP))
    # Actual tiled HBM traffic: x re-read grid_n times, w re-read grid_b times.
    cost = pl.CostEstimate(
        flops=int(2 * b_p * k_p * n_p),
        transcendentals=0,
        bytes_accessed=int(
            (b_p * k_p * grid_n + k_p * n_p * grid_b + n_p + b_p * n_p)
            * itemsize
        ),
    )

    out = pl.pallas_call(
        _linear_tiled_kernel,
        out_shape=jax.ShapeDtypeStruct((b_p, n_p), dtype),
        grid_spec=pltpu.PrefetchScalarGridSpec(
            num_scalar_prefetch=0,
            grid=(grid_b, grid_n, grid_k),
            in_specs=[
                pl.BlockSpec((tb, tk), lambda i, j, k: (i, k)),   # x tile
                pl.BlockSpec((tk, tn), lambda i, j, k: (k, j)),   # weight tile
                pl.BlockSpec((1, tn), lambda i, j, k: (0, j)),    # bias tile
            ],
            out_specs=pl.BlockSpec((tb, tn), lambda i, j, k: (i, j)),
            scratch_shapes=[pltpu.VMEM((tb, tn), jnp.float32)],
        ),
        compiler_params=pltpu.CompilerParams(
            dimension_semantics=("parallel", "parallel", "arbitrary"),
            vmem_limit_bytes=vmem_limit,
        ),
        cost_estimate=cost,
    )(x_p, w_p, b_pd)
    return out[:B, :out_f]


# ---------------------------------------------------------------------------
# Parameter init (mimics nn.Linear defaults) and self-test
# ---------------------------------------------------------------------------

def init_linear_params(key, in_filter, out_filter, dtype=jnp.float32):
    """nn.Linear-style init: U(-1/sqrt(in), 1/sqrt(in)) for weight and bias."""
    k_w, k_b = jax.random.split(key)
    bound = 1.0 / (in_filter ** 0.5)
    weight = jax.random.uniform(
        k_w, (out_filter, in_filter), jnp.float32, minval=-bound, maxval=bound
    )
    bias = jax.random.uniform(
        k_b, (out_filter,), jnp.float32, minval=-bound, maxval=bound
    )
    return weight.T.astype(dtype), bias.reshape(1, out_filter).astype(dtype)


if __name__ == "__main__":
    key = jax.random.PRNGKey(0)
    k_x1, k_p1, k_x2, k_p2, k_x3, k_p3 = jax.random.split(key, 6)

    # --- small demo matching the module spec (weight-resident path) ---------
    batch, in_filter, out_filter = 8, 32, 16
    x = jax.random.normal(k_x1, (batch, in_filter), jnp.float32)
    w_t, b = init_linear_params(k_p1, in_filter, out_filter)
    out = linear_pallas(x, w_t, b)
    jax.block_until_ready(out)
    ref = x @ w_t + b
    assert out.shape == (batch, out_filter)
    assert jnp.allclose(out, ref, atol=1e-5, rtol=1e-5), "small f32 mismatch"

    # --- non-divisible shapes: exercises padding + lane-dense out padding ----
    b3, in3, out3 = 10, 33, 20
    x3 = jax.random.normal(k_x3, (b3, in3), jnp.float32)
    w3, bias3 = init_linear_params(k_p3, in3, out3)
    out3_p = linear_pallas(x3, w3, bias3)
    jax.block_until_ready(out3_p)
    ref3 = x3 @ w3 + bias3
    assert out3_p.shape == (b3, out3)
    assert jnp.allclose(out3_p, ref3, atol=1e-5, rtol=1e-5), "padded mismatch"

    # --- larger check: exercises the general 3-D tiled path (K accumulation) -
    b2, in2, out2 = 256, 2304, 2048    # weight ~18 MiB f32 -> tiled path
    x2 = jax.random.normal(k_x2, (b2, in2), jnp.float32)
    w2, bias2 = init_linear_params(k_p2, in2, out2)
    out2_p = linear_pallas(x2, w2, bias2)
    jax.block_until_ready(out2_p)
    ref2 = x2 @ w2 + bias2
    assert jnp.allclose(out2_p, ref2, atol=1e-2, rtol=1e-3), "tiled f32 mismatch"

    print("KERNEL_OK")
</pallas_src>

<mosaic_0001>
module attributes {stable_mosaic.version = 11 : i64} {
  func.func @_linear_wres_kernel(%arg0: i32, %arg1: memref<8x128xf32, #tpu.memory_space<vmem>>, %arg2: memref<128x128xf32, #tpu.memory_space<vmem>>, %arg3: memref<1x128xf32, #tpu.memory_space<vmem>>, %arg4: memref<8x128xf32, #tpu.memory_space<vmem>>) attributes {dimension_semantics = [#tpu.dimension_semantics<parallel>], iteration_bounds = array<i64: 1>, scalar_prefetch = 0 : i64, scratch_operands = 0 : i64, tpu.core_type = #tpu.core_type<tc>, window_params = [{transform_indices = @transform_0, window_bounds = array<i64: 8, 128>}, {pipeline_mode = #tpu.pipeline_mode<synchronous>, transform_indices = @transform_1, window_bounds = array<i64: 128, 128>}, {pipeline_mode = #tpu.pipeline_mode<synchronous>, transform_indices = @transform_2, window_bounds = array<i64: 1, 128>}, {transform_indices = @transform_3, window_bounds = array<i64: 8, 128>}]} {
    %c0 = arith.constant 0 : index
    %c0_0 = arith.constant 0 : index
    %0 = vector.load %arg1[%c0, %c0_0] : memref<8x128xf32, #tpu.memory_space<vmem>>, vector<8x128xf32>
    %c0_1 = arith.constant 0 : index
    %c0_2 = arith.constant 0 : index
    %1 = vector.load %arg2[%c0_1, %c0_2] : memref<128x128xf32, #tpu.memory_space<vmem>>, vector<128x128xf32>
    %cst = arith.constant dense<0.000000e+00> : vector<8x128xf32>
    %2 = tpu.matmul %0, %1, %cst {dimension_numbers = #tpu.dot_dimension_numbers<[1], [0], [0], [1], [0, 0, 1, 1], [], []>} : vector<8x128xf32>, vector<128x128xf32>, vector<8x128xf32> -> vector<8x128xf32>
    %c0_3 = arith.constant 0 : index
    %c0_4 = arith.constant 0 : index
    %3 = vector.load %arg3[%c0_3, %c0_4] : memref<1x128xf32, #tpu.memory_space<vmem>>, vector<1x128xf32>
    %4 = vector.broadcast %3 : vector<1x128xf32> to vector<8x128xf32>
    %5 = arith.addf %2, %4 : vector<8x128xf32>
    %c0_5 = arith.constant 0 : index
    %c0_6 = arith.constant 0 : index
    %6 = vector.load %arg4[%c0_5, %c0_6] : memref<8x128xf32, #tpu.memory_space<vmem>>, vector<8x128xf32>
    tpu.vector_store %arg4[%c0_5, %c0_6], %5 {strides = array<i32>} : memref<8x128xf32, #tpu.memory_space<vmem>>, vector<8x128xf32>,
    return
  }
  func.func @transform_0(%arg0: i32) -> (i32, i32) {
    %c0_i32 = arith.constant 0 : i32
    %c0_i32_0 = arith.constant 0 : i32
    return %arg0, %c0_i32 : i32, i32
  }
  func.func @transform_1(%arg0: i32) -> (i32, i32) {
    %c0_i32 = arith.constant 0 : i32
    %c0_i32_0 = arith.constant 0 : i32
    %c0_i32_1 = arith.constant 0 : i32
    return %c0_i32, %c0_i32_0 : i32, i32
  }
  func.func @transform_2(%arg0: i32) -> (i32, i32) {
    %c0_i32 = arith.constant 0 : i32
    %c0_i32_0 = arith.constant 0 : i32
    %c0_i32_1 = arith.constant 0 : i32
    return %c0_i32, %c0_i32_0 : i32, i32
  }
  func.func @transform_3(%arg0: i32) -> (i32, i32) {
    %c0_i32 = arith.constant 0 : i32
    %c0_i32_0 = arith.constant 0 : i32
    return %arg0, %c0_i32 : i32, i32
  }
}

</mosaic_0001>

<llo_original>
// kernel: linear_pallas.1
$region0: #{linear_pallas.1}
  #allocation0 [shape = 'u32[]', space=smem, size = 0x4, offset = 0x4, fixed_abs, tag = 'smem constant byte address 0x4 - core index']
  #allocation1 [shape = 'u32[144,128]{1,0:T(1,128)}', space=vmem, size = 0x12000, scoped, tag = 'internal scratch']
  %s0 = inlined_call_operand.vmem [shape: f32[8,128], index: 0, kind: input, shape index: {}]
  %s1 = inlined_call_operand.vmem [shape: f32[128,128], index: 1, kind: input, shape index: {}]
  %s2 = inlined_call_operand.vmem [shape: f32[1,128], index: 2, kind: input, shape index: {}]
  %s3 = inlined_call_operand.hbm [shape: f32[8,128], index: 3, kind: output, shape index: {}]
  %s4 = sld [smem:[#allocation0]]
  $region22: #{linear_pallas.1} parent=0
    _
  %s6 = ssub.s32 1, %s4
  %s7 = scalar_select 0, %s6, %s4
  $region1: #{linear_pallas.1} parent=0
    #allocation2 [shape = 'u8[4096]{0}', space=vmem, size = 0x1000, scoped, tag = 'output window, operand 0, single buffered']
    #allocation3 [shape = 's32[1]{0}', space=sflag, size = 0x4, scoped, tag = 'scoped memory for linear_pallas.1']
    %8 = vsyncpa [#allocation3], 0
    // Predicated region
    $region2: #{linear_pallas.1} parent=1 // pred_check
      _
    $region3: #{linear_pallas.1} parent=1 // pred_check_branch
      %10 = sbr.rel (0) target = $region5
    $region4: #{linear_pallas.1} parent=1 // pred_region
      _
    $region5: #{linear_pallas.1} parent=1 // pred_fallthru
      _
    // Predicated region
    $region6: #{linear_pallas.1} parent=1 // pred_check
      _
    $region7: #{linear_pallas.1} parent=1 // pred_check_branch
      %12 = sbr.rel (0) target = $region9
    $region8: #{linear_pallas.1} parent=1 // pred_region
      _
    $region9: #{linear_pallas.1} parent=1 // pred_fallthru
      _
    // Predicated region
    $region10: #{linear_pallas.1} parent=1 // pred_check
      _
    $region11: #{linear_pallas.1} parent=1 // pred_check_branch
      %14 = sbr.rel (0) target = $region13
    $region12: #{linear_pallas.1} parent=1 // pred_region
      _
    $region13: #{linear_pallas.1} parent=1 // pred_fallthru
      _
    %v15 = vld [vmem:[%s0] sm:$0xff]
    %v16 = vld [vmem:[%s1] sm:$0xff]
    %v17 = vld [vmem:[%s1 + $0x8] sm:$0xff]
    %v18 = vld [vmem:[%s1 + $0x10] sm:$0xff]
    %v19 = vld [vmem:[%s1 + $0x18] sm:$0xff]
    %v20 = vld [vmem:[%s1 + $0x20] sm:$0xff]
    %v21 = vld [vmem:[%s1 + $0x28] sm:$0xff]
    %v22 = vld [vmem:[%s1 + $0x30] sm:$0xff]
    %v23 = vld [vmem:[%s1 + $0x38] sm:$0xff]
    %v24 = vld [vmem:[%s1 + $0x40] sm:$0xff]
    %v25 = vld [vmem:[%s1 + $0x48] sm:$0xff]
    %v26 = vld [vmem:[%s1 + $0x50] sm:$0xff]
    %v27 = vld [vmem:[%s1 + $0x58] sm:$0xff]
    %v28 = vld [vmem:[%s1 + $0x60] sm:$0xff]
    %v29 = vld [vmem:[%s1 + $0x68] sm:$0xff]
    %v30 = vld [vmem:[%s1 + $0x70] sm:$0xff]
    %v31 = vld [vmem:[%s1 + $0x78] sm:$0xff]
    %v32 = vld [vmem:[%s2] sm:$0x1]
    %v34 = vlaneseq
    %v35 = vshrl.u32 %v34, 7
    %v36 = vsub.s32 0, %v35
    %v37 = vrot.slane %v32, %v36
    %39 = vmatprep.subr.mxu0 0.0
    %40 = vmatpush1.msra.mxu0 %v31
    %41 = vmatprep.subr.mxu0 0.0
    %42 = vmatpush1.msra.mxu0 %v30
    %43 = vmatprep.subr.mxu0 0.0
    %44 = vmatpush1.msra.mxu0 %v29
    %45 = vmatprep.subr.mxu0 0.0
    %46 = vmatpush1.msra.mxu0 %v28
    %47 = vmatprep.subr.mxu0 0.0
    %48 = vmatpush1.msra.mxu0 %v27
    %49 = vmatprep.subr.mxu0 0.0
    %50 = vmatpush1.msra.mxu0 %v26
    %51 = vmatprep.subr.mxu0 0.0
    %52 = vmatpush1.msra.mxu0 %v25
    %53 = vmatprep.subr.mxu0 0.0
    %54 = vmatpush1.msra.mxu0 %v24
    %55 = vmatprep.subr.mxu0 0.0
    %56 = vmatpush1.msra.mxu0 %v23
    %57 = vmatprep.subr.mxu0 0.0
    %58 = vmatpush1.msra.mxu0 %v22
    %59 = vmatprep.subr.mxu0 0.0
    %60 = vmatpush1.msra.mxu0 %v21
    %61 = vmatprep.subr.mxu0 0.0
    %62 = vmatpush1.msra.mxu0 %v20
    %63 = vmatprep.subr.mxu0 0.0
    %64 = vmatpush1.msra.mxu0 %v19
    %65 = vmatprep.subr.mxu0 0.0
    %66 = vmatpush1.msra.mxu0 %v18
    %67 = vmatprep.subr.mxu0 0.0
    %68 = vmatpush1.msra.mxu0 %v17
    %69 = vmatprep.subr.mxu0 0.0
    %70 = vmatpush1.msra.mxu0 %v16
    %71 = vmatprep.subr.mxu0 0.0
    %72 = vmatpush2.msra.mxu0 0.0
    %73 = vmatprep.subr.mxu0 0.0
    %74 = vmatpush2.msra.mxu0 0.0
    %75 = vmatprep.subr.mxu0 0.0
    %76 = vmatpush2.msra.mxu0 0.0
    %77 = vmatprep.subr.mxu0 0.0
    %78 = vmatpush2.msra.mxu0 0.0
    %79 = vmatprep.subr.mxu0 0.0
    %80 = vmatpush2.msra.mxu0 0.0
    %81 = vmatprep.subr.mxu0 0.0
    %82 = vmatpush2.msra.mxu0 0.0
    %83 = vmatprep.subr.mxu0 0.0
    %84 = vmatpush2.msra.mxu0 0.0
    %85 = vmatprep.subr.mxu0 0.0
    %86 = vmatpush2.msra.mxu0 0.0
    %87 = vmatprep.subr.mxu0 0.0
    %88 = vmatpush2.msra.mxu0 0.0
    %89 = vmatprep.subr.mxu0 0.0
    %90 = vmatpush2.msra.mxu0 0.0
    %91 = vmatprep.subr.mxu0 0.0
    %92 = vmatpush2.msra.mxu0 0.0
    %93 = vmatprep.subr.mxu0 0.0
    %94 = vmatpush2.msra.mxu0 0.0
    %95 = vmatprep.subr.mxu0 0.0
    %96 = vmatpush2.msra.mxu0 0.0
    %97 = vmatprep.subr.mxu0 0.0
    %98 = vmatpush2.msra.mxu0 0.0
    %99 = vmatprep.subr.mxu0 0.0
    %100 = vmatpush2.msra.mxu0 0.0
    %101 = vmatprep.subr.mxu0 0.0
    %102 = vmatpush2.msra.mxu0 0.0
    %103 = vmatprep.mubr.f32.mxu0 0.0
    %104 = vmatmul.mubr.f32.gmra.mxu0 %v15
    %v105 = vpop.f32.mrf.mxu0
    %v106 = vadd.f32 %v37, %v105
    %v107 = vpop.f32.mrf.mxu0
    %108 = vdwg.mxu0
    %109 = vst [vmem:[#allocation2] sm:$0xff] %v106
    // Predicated region
    $region14: #{linear_pallas.1} parent=1 // pred_check
      _
    $region15: #{linear_pallas.1} parent=1 // pred_check_branch
      %111 = sbr.rel (0) target = $region17
    $region16: #{linear_pallas.1} parent=1 // pred_region
      %s113 = ssub.s32 128, 128
      %114 = vsyncadd [#allocation3], %s113
      %s116 = sshll.u32 [#allocation2], 4
      %s117 = int_to_ptr.vmem [resolvable:$true] %s116
      %119 = dma.vmem_to_hbm [thread:$0]  %s117, 128, %s3, [#allocation3]
    $region17: #{linear_pallas.1} parent=1 // pred_fallthru
      _
    // Predicated region
    $region18: #{linear_pallas.1} parent=1 // pred_check
      _
    $region19: #{linear_pallas.1} parent=1 // pred_check_branch
      %121 = sbr.rel (0) target = $region21
    $region20: #{linear_pallas.1} parent=1 // pred_region
      %122 = dma.done [#allocation3], 128
    $region21: #{linear_pallas.1} parent=1 // pred_fallthru
      _
    %123 = vsyncpa [#allocation3], 1

</llo_original>
